<compile_context>
chip_gen: v7x
topology: tpu7x:2x2x1
jax: 0.10.0
libtpu: 0.0.40
codegen_flags: <defaults>
</compile_context>

<pallas_src>
import functools
import math

import jax
import jax.numpy as jnp
from jax.experimental import pallas as pl
from jax.experimental.pallas import tpu as pltpu


def _tfn_kernel(t_ref, v_ref, a_ref, w1_ref, b1_ref, w2_ref, b2_ref, o_ref,
                *, dv, da, hp):
    f32 = jnp.float32
    t = t_ref[...].astype(f32)                       # (TM, Dt)
    v = v_ref[...].astype(f32)                       # (TM, Dv)
    a = a_ref[...].astype(f32)                       # (TM, Da)
    tm = t.shape[0]

    ones = jnp.ones((tm, 1), f32)
    t1 = jnp.concatenate([ones, t], axis=1)          # (TM, Dt1)  [1; t]

    # tv[n, j*Dt1 + i] = v1[n, j] * t1[n, i]  (v-major).  The j = 0 block
    # (v1[:, 0] == 1) is t1 itself, so only Dv column-broadcast products
    # are issued; everything stays rank-2 in f32 (v5e-safe VPU path).
    blocks = [t1] + [v[:, j:j + 1] * t1 for j in range(dv)]
    tv = jnp.concatenate(blocks, axis=1)             # (TM, Dv1*Dt1)

    # One MXU matmul absorbs the (t x v) part of the TFN tensor product:
    #   p[n, k*Hp + c] = sum_{ij} t1[n,i] v1[n,j] W1[i*Dv1*Da1 + j*Da1 + k, c]
    p = jnp.dot(tv.astype(w1_ref.dtype), w1_ref[...],
                preferred_element_type=f32)          # (TM, Da1*Hp) f32

    # Fold the smallest (audio) dimension: Da1 lane-aligned Hp-wide slices,
    # k = 0 term (a1[:,0] == 1) is a plain copy.  Tree-sum the partials so
    # the scaled-adds co-issue across VALU slots instead of one serial chain.
    parts = [p[:, 0:hp]] + [a[:, k:k + 1] * p[:, (k + 1) * hp:(k + 2) * hp]
                            for k in range(da)]
    while len(parts) > 1:
        nxt = [parts[i] + parts[i + 1] for i in range(0, len(parts) - 1, 2)]
        if len(parts) % 2:
            nxt.append(parts[-1])
        parts = nxt
    acc = parts[0]                                   # (TM, Hp)

    h = jnp.maximum(acc + b1_ref[...], 0.0)          # ReLU, padded cols stay 0
    y = jnp.dot(h.astype(w2_ref.dtype), w2_ref[...],
                preferred_element_type=f32) + b2_ref[...]
    o_ref[...] = jnp.maximum(y, 0.0).astype(o_ref.dtype)


def tfn_fusion(text, video, audio, params, *, tm=1024,
               compute_dtype=jnp.bfloat16):
    """TFN late fusion.  text/video/audio: [S, B, D*] -> [S, B, U] (f32)."""
    w1, b1, w2, b2 = params["w1"], params["b1"], params["w2"], params["b2"]
    f32 = jnp.float32

    S, B, Dt = text.shape
    Dv = video.shape[-1]
    Da = audio.shape[-1]
    Dt1, Dv1, Da1 = Dt + 1, Dv + 1, Da + 1
    Z = Dt1 * Dv1 * Da1
    H = w1.shape[-1]
    U = w2.shape[-1]
    assert w1.shape == (Z, H) and w2.shape == (H, U)
    N = S * B

    # ---- row tile: large (amortize per-step overhead), multiple of 8,
    # ---- capped so the grid keeps >= 2 parallel steps (v7x: 2 TensorCores).
    def _round8(x):
        return max(8, ((x + 7) // 8) * 8)

    tm = _round8(min(tm, N))
    if N > 8:
        tm = min(tm, _round8(pl.cdiv(N, 2)))
    tm = _round8(tm)
    Np = pl.cdiv(N, tm) * tm

    # Modality row streams (reshape is free; pad only if needed).
    t2 = text.reshape(N, Dt).astype(f32)
    v2 = video.reshape(N, Dv).astype(f32)
    a2 = audio.reshape(N, Da).astype(f32)
    if Np != N:
        pad = ((0, Np - N), (0, 0))
        t2 = jnp.pad(t2, pad)
        v2 = jnp.pad(v2, pad)
        a2 = jnp.pad(a2, pad)

    # ---- weights: lane-dense, fold-the-audio-dim layout -------------------
    # w1r[j*Dt1 + i, k*Hp + c] = w1[i*Dv1*Da1 + j*Da1 + k, c]  (zero-padded c).
    Hp = 128 * pl.cdiv(H, 128)
    w1r = w1.astype(f32).reshape(Dt1, Dv1, Da1, H)
    w1r = jnp.pad(w1r, ((0, 0), (0, 0), (0, 0), (0, Hp - H)))
    w1r = (w1r.transpose(1, 0, 2, 3)
              .reshape(Dv1 * Dt1, Da1 * Hp).astype(compute_dtype))

    b1p = jnp.pad(b1.astype(f32).reshape(1, H), ((0, 0), (0, Hp - H)))

    Up = 128 * pl.cdiv(U, 128)
    w2p = jnp.pad(w2.astype(f32),
                  ((0, Hp - H), (0, Up - U))).astype(compute_dtype)
    b2p = jnp.pad(b2.astype(f32).reshape(1, U), ((0, 0), (0, Up - U)))

    kernel = functools.partial(_tfn_kernel, dv=Dv, da=Da, hp=Hp)

    itemsize = jnp.dtype(compute_dtype).itemsize
    cost = pl.CostEstimate(
        flops=int(2 * Np * (Dv1 * Dt1 * Da1 * Hp + Hp * Up)
                  + 2 * Np * Da1 * Hp),
        transcendentals=0,
        bytes_accessed=int(Np * (Dt + Dv + Da) * 4
                           + w1r.size * itemsize + w2p.size * itemsize
                           + (Hp + Up) * 4 + Np * Up * 2),
    )

    out = pl.pallas_call(
        kernel,
        out_shape=jax.ShapeDtypeStruct((Np, Up), jnp.bfloat16),
        grid=(Np // tm,),
        in_specs=[
            pl.BlockSpec((tm, Dt), lambda i: (i, 0)),
            pl.BlockSpec((tm, Dv), lambda i: (i, 0)),
            pl.BlockSpec((tm, Da), lambda i: (i, 0)),
            pl.BlockSpec((Dv1 * Dt1, Da1 * Hp), lambda i: (0, 0)),
            pl.BlockSpec((1, Hp), lambda i: (0, 0)),
            pl.BlockSpec((Hp, Up), lambda i: (0, 0)),
            pl.BlockSpec((1, Up), lambda i: (0, 0)),
        ],
        out_specs=pl.BlockSpec((tm, Up), lambda i: (i, 0)),
        compiler_params=pltpu.CompilerParams(
            dimension_semantics=("parallel",)),
        cost_estimate=cost,
    )(t2, v2, a2, w1r, b1p, w2p, b2p)

    return out[:N, :U].astype(f32).reshape(S, B, U)


# "MODEL_MAP" dispatcher, mirroring fusionPlugin.__init__.
MODEL_MAP = {"TFN": tfn_fusion}


def fusion_plugin_forward(text, video, audio, params, fusion_module="TFN"):
    return MODEL_MAP[fusion_module](text, video, audio, params)


def init_params(key, Dt, Dv, Da, hidden, out_dim):
    """Deterministic PyTorch-Linear-style init for the post-fusion MLP."""
    Z = (Dt + 1) * (Dv + 1) * (Da + 1)
    k1, k2, k3, k4 = jax.random.split(key, 4)
    lim1 = 1.0 / math.sqrt(Z)
    lim2 = 1.0 / math.sqrt(hidden)
    return {
        "w1": jax.random.uniform(k1, (Z, hidden), jnp.float32, -lim1, lim1),
        "b1": jax.random.uniform(k2, (hidden,), jnp.float32, -lim1, lim1),
        "w2": jax.random.uniform(k3, (hidden, out_dim), jnp.float32, -lim2, lim2),
        "b2": jax.random.uniform(k4, (out_dim,), jnp.float32, -lim2, lim2),
    }


def tfn_reference(text, video, audio, params):
    """Pure-JAX (f32) reference of the TFN forward pass."""
    S, B, Dt = text.shape
    Dv = video.shape[-1]
    Da = audio.shape[-1]
    N = S * B
    ones = jnp.ones((N, 1), jnp.float32)
    t1 = jnp.concatenate([ones, text.reshape(N, Dt)], axis=1)
    v1 = jnp.concatenate([ones, video.reshape(N, Dv)], axis=1)
    a1 = jnp.concatenate([ones, audio.reshape(N, Da)], axis=1)
    z = jnp.einsum("ni,nj,nk->nijk", t1, v1, a1).reshape(N, -1)
    h = jax.nn.relu(z @ params["w1"] + params["b1"])
    y = jax.nn.relu(h @ params["w2"] + params["b2"])
    return y.reshape(S, B, -1)


if __name__ == "__main__":
    Dt, Dv, Da = 16, 8, 4       # text / video / audio dims
    hidden, U = 32, 24          # post-fusion hidden dim, utterance dim
    tol = 5e-2                  # bf16-matmul tolerance vs the f32 reference

    key = jax.random.PRNGKey(0)
    kp, kd = jax.random.split(key)
    params = init_params(kp, Dt, Dv, Da, hidden, U)

    ok = True
    # (S, B) shapes: tiny (multi-step small tiles) and modest (bigger tiles).
    for (S, B) in [(8, 2), (64, 4)]:
        kt, kv, ka, kd = jax.random.split(kd, 4)
        text = jax.random.normal(kt, (S, B, Dt), jnp.float32)
        video = jax.random.normal(kv, (S, B, Dv), jnp.float32)
        audio = jax.random.normal(ka, (S, B, Da), jnp.float32)

        ref = tfn_reference(text, video, audio, params)
        out = fusion_plugin_forward(text, video, audio, params,
                                    fusion_module="TFN")
        out = jax.block_until_ready(out)

        assert out.shape == (S, B, U), out.shape
        err = float(jnp.max(jnp.abs(out - ref)))
        if not (err < tol):
            ok = False
            print(f"MISMATCH S={S} B={B} max_abs_err={err}")

    if ok:
        print("KERNEL_OK")
</pallas_src>

<mosaic_0001>
module attributes {stable_mosaic.version = 11 : i64} {
  func.func @_tfn_kernel(%arg0: i32, %arg1: memref<8x16xf32, #tpu.memory_space<vmem>>, %arg2: memref<8x8xf32, #tpu.memory_space<vmem>>, %arg3: memref<8x4xf32, #tpu.memory_space<vmem>>, %arg4: memref<153x640xbf16, #tpu.memory_space<vmem>>, %arg5: memref<1x128xf32, #tpu.memory_space<vmem>>, %arg6: memref<128x128xbf16, #tpu.memory_space<vmem>>, %arg7: memref<1x128xf32, #tpu.memory_space<vmem>>, %arg8: memref<8x128xbf16, #tpu.memory_space<vmem>>) attributes {dimension_semantics = [#tpu.dimension_semantics<parallel>], iteration_bounds = array<i64: 2>, scalar_prefetch = 0 : i64, scratch_operands = 0 : i64, tpu.core_type = #tpu.core_type<tc>, window_params = [{transform_indices = @transform_0, window_bounds = array<i64: 8, 16>}, {transform_indices = @transform_1, window_bounds = array<i64: 8, 8>}, {transform_indices = @transform_2, window_bounds = array<i64: 8, 4>}, {pipeline_mode = #tpu.pipeline_mode<synchronous>, transform_indices = @transform_3, window_bounds = array<i64: 153, 640>}, {pipeline_mode = #tpu.pipeline_mode<synchronous>, transform_indices = @transform_4, window_bounds = array<i64: 1, 128>}, {pipeline_mode = #tpu.pipeline_mode<synchronous>, transform_indices = @transform_5, window_bounds = array<i64: 128, 128>}, {pipeline_mode = #tpu.pipeline_mode<synchronous>, transform_indices = @transform_6, window_bounds = array<i64: 1, 128>}, {transform_indices = @transform_7, window_bounds = array<i64: 8, 128>}]} {
    %c0 = arith.constant 0 : index
    %c0_0 = arith.constant 0 : index
    %0 = vector.load %arg1[%c0, %c0_0] : memref<8x16xf32, #tpu.memory_space<vmem>>, vector<8x16xf32>
    %c0_1 = arith.constant 0 : index
    %c0_2 = arith.constant 0 : index
    %1 = vector.load %arg2[%c0_1, %c0_2] : memref<8x8xf32, #tpu.memory_space<vmem>>, vector<8x8xf32>
    %c0_3 = arith.constant 0 : index
    %c0_4 = arith.constant 0 : index
    %2 = vector.load %arg3[%c0_3, %c0_4] : memref<8x4xf32, #tpu.memory_space<vmem>>, vector<8x4xf32>
    %cst = arith.constant 1.000000e+00 : f32
    %3 = vector.broadcast %cst : f32 to vector<8x1xf32>
    %4 = tpu.concatenate %3, %0 in 1 : vector<8x1xf32>, vector<8x16xf32> -> vector<8x17xf32>
    %5 = vector.extract_strided_slice %1 {offsets = [0, 0], sizes = [8, 1], strides = [1, 1]} : vector<8x8xf32> to vector<8x1xf32>
    %6 = vector.broadcast %5 : vector<8x1xf32> to vector<8x17xf32>
    %7 = arith.mulf %6, %4 : vector<8x17xf32>
    %8 = vector.extract_strided_slice %1 {offsets = [0, 1], sizes = [8, 1], strides = [1, 1]} : vector<8x8xf32> to vector<8x1xf32>
    %9 = vector.broadcast %8 : vector<8x1xf32> to vector<8x17xf32>
    %10 = arith.mulf %9, %4 : vector<8x17xf32>
    %11 = vector.extract_strided_slice %1 {offsets = [0, 2], sizes = [8, 1], strides = [1, 1]} : vector<8x8xf32> to vector<8x1xf32>
    %12 = vector.broadcast %11 : vector<8x1xf32> to vector<8x17xf32>
    %13 = arith.mulf %12, %4 : vector<8x17xf32>
    %14 = vector.extract_strided_slice %1 {offsets = [0, 3], sizes = [8, 1], strides = [1, 1]} : vector<8x8xf32> to vector<8x1xf32>
    %15 = vector.broadcast %14 : vector<8x1xf32> to vector<8x17xf32>
    %16 = arith.mulf %15, %4 : vector<8x17xf32>
    %17 = vector.extract_strided_slice %1 {offsets = [0, 4], sizes = [8, 1], strides = [1, 1]} : vector<8x8xf32> to vector<8x1xf32>
    %18 = vector.broadcast %17 : vector<8x1xf32> to vector<8x17xf32>
    %19 = arith.mulf %18, %4 : vector<8x17xf32>
    %20 = vector.extract_strided_slice %1 {offsets = [0, 5], sizes = [8, 1], strides = [1, 1]} : vector<8x8xf32> to vector<8x1xf32>
    %21 = vector.broadcast %20 : vector<8x1xf32> to vector<8x17xf32>
    %22 = arith.mulf %21, %4 : vector<8x17xf32>
    %23 = vector.extract_strided_slice %1 {offsets = [0, 6], sizes = [8, 1], strides = [1, 1]} : vector<8x8xf32> to vector<8x1xf32>
    %24 = vector.broadcast %23 : vector<8x1xf32> to vector<8x17xf32>
    %25 = arith.mulf %24, %4 : vector<8x17xf32>
    %26 = vector.extract_strided_slice %1 {offsets = [0, 7], sizes = [8, 1], strides = [1, 1]} : vector<8x8xf32> to vector<8x1xf32>
    %27 = vector.broadcast %26 : vector<8x1xf32> to vector<8x17xf32>
    %28 = arith.mulf %27, %4 : vector<8x17xf32>
    %29 = tpu.concatenate %4, %7, %10, %13, %16, %19, %22, %25, %28 in 1 : vector<8x17xf32>, vector<8x17xf32>, vector<8x17xf32>, vector<8x17xf32>, vector<8x17xf32>, vector<8x17xf32>, vector<8x17xf32>, vector<8x17xf32>, vector<8x17xf32> -> vector<8x153xf32>
    %30 = arith.truncf %29 : vector<8x153xf32> to vector<8x153xbf16>
    %c0_5 = arith.constant 0 : index
    %c0_6 = arith.constant 0 : index
    %31 = vector.load %arg4[%c0_5, %c0_6] : memref<153x640xbf16, #tpu.memory_space<vmem>>, vector<153x640xbf16>
    %cst_7 = arith.constant dense<0.000000e+00> : vector<8x640xf32>
    %32 = tpu.matmul %30, %31, %cst_7 {dimension_numbers = #tpu.dot_dimension_numbers<[1], [0], [0], [1], [0, 0, 1, 1], [], []>} : vector<8x153xbf16>, vector<153x640xbf16>, vector<8x640xf32> -> vector<8x640xf32>
    %33 = vector.extract_strided_slice %32 {offsets = [0, 0], sizes = [8, 128], strides = [1, 1]} : vector<8x640xf32> to vector<8x128xf32>
    %34 = vector.extract_strided_slice %2 {offsets = [0, 0], sizes = [8, 1], strides = [1, 1]} : vector<8x4xf32> to vector<8x1xf32>
    %35 = vector.extract_strided_slice %32 {offsets = [0, 128], sizes = [8, 128], strides = [1, 1]} : vector<8x640xf32> to vector<8x128xf32>
    %36 = vector.broadcast %34 : vector<8x1xf32> to vector<8x128xf32>
    %37 = arith.mulf %36, %35 : vector<8x128xf32>
    %38 = vector.extract_strided_slice %2 {offsets = [0, 1], sizes = [8, 1], strides = [1, 1]} : vector<8x4xf32> to vector<8x1xf32>
    %39 = vector.extract_strided_slice %32 {offsets = [0, 256], sizes = [8, 128], strides = [1, 1]} : vector<8x640xf32> to vector<8x128xf32>
    %40 = vector.broadcast %38 : vector<8x1xf32> to vector<8x128xf32>
    %41 = arith.mulf %40, %39 : vector<8x128xf32>
    %42 = vector.extract_strided_slice %2 {offsets = [0, 2], sizes = [8, 1], strides = [1, 1]} : vector<8x4xf32> to vector<8x1xf32>
    %43 = vector.extract_strided_slice %32 {offsets = [0, 384], sizes = [8, 128], strides = [1, 1]} : vector<8x640xf32> to vector<8x128xf32>
    %44 = vector.broadcast %42 : vector<8x1xf32> to vector<8x128xf32>
    %45 = arith.mulf %44, %43 : vector<8x128xf32>
    %46 = vector.extract_strided_slice %2 {offsets = [0, 3], sizes = [8, 1], strides = [1, 1]} : vector<8x4xf32> to vector<8x1xf32>
    %47 = vector.extract_strided_slice %32 {offsets = [0, 512], sizes = [8, 128], strides = [1, 1]} : vector<8x640xf32> to vector<8x128xf32>
    %48 = vector.broadcast %46 : vector<8x1xf32> to vector<8x128xf32>
    %49 = arith.mulf %48, %47 : vector<8x128xf32>
    %50 = arith.addf %33, %37 : vector<8x128xf32>
    %51 = arith.addf %41, %45 : vector<8x128xf32>
    %52 = arith.addf %50, %51 : vector<8x128xf32>
    %53 = arith.addf %52, %49 : vector<8x128xf32>
    %c0_8 = arith.constant 0 : index
    %c0_9 = arith.constant 0 : index
    %54 = vector.load %arg5[%c0_8, %c0_9] : memref<1x128xf32, #tpu.memory_space<vmem>>, vector<1x128xf32>
    %55 = vector.broadcast %54 : vector<1x128xf32> to vector<8x128xf32>
    %56 = arith.addf %53, %55 : vector<8x128xf32>
    %cst_10 = arith.constant 0.000000e+00 : f32
    %57 = vector.broadcast %cst_10 : f32 to vector<8x128xf32>
    %58 = arith.maximumf %56, %57 : vector<8x128xf32>
    %59 = arith.truncf %58 : vector<8x128xf32> to vector<8x128xbf16>
    %c0_11 = arith.constant 0 : index
    %c0_12 = arith.constant 0 : index
    %60 = vector.load %arg6[%c0_11, %c0_12] : memref<128x128xbf16, #tpu.memory_space<vmem>>, vector<128x128xbf16>
    %cst_13 = arith.constant dense<0.000000e+00> : vector<8x128xf32>
    %61 = tpu.matmul %59, %60, %cst_13 {dimension_numbers = #tpu.dot_dimension_numbers<[1], [0], [0], [1], [0, 0, 1, 1], [], []>} : vector<8x128xbf16>, vector<128x128xbf16>, vector<8x128xf32> -> vector<8x128xf32>
    %c0_14 = arith.constant 0 : index
    %c0_15 = arith.constant 0 : index
    %62 = vector.load %arg7[%c0_14, %c0_15] : memref<1x128xf32, #tpu.memory_space<vmem>>, vector<1x128xf32>
    %63 = vector.broadcast %62 : vector<1x128xf32> to vector<8x128xf32>
    %64 = arith.addf %61, %63 : vector<8x128xf32>
    %cst_16 = arith.constant 0.000000e+00 : f32
    %65 = vector.broadcast %cst_16 : f32 to vector<8x128xf32>
    %66 = arith.maximumf %64, %65 : vector<8x128xf32>
    %67 = arith.truncf %66 : vector<8x128xf32> to vector<8x128xbf16>
    %c0_17 = arith.constant 0 : index
    %c0_18 = arith.constant 0 : index
    %68 = vector.load %arg8[%c0_17, %c0_18] : memref<8x128xbf16, #tpu.memory_space<vmem>>, vector<8x128xbf16>
    tpu.vector_store %arg8[%c0_17, %c0_18], %67 {strides = array<i32>} : memref<8x128xbf16, #tpu.memory_space<vmem>>, vector<8x128xbf16>,
    return
  }
  func.func @transform_0(%arg0: i32) -> (i32, i32) {
    %c0_i32 = arith.constant 0 : i32
    %c0_i32_0 = arith.constant 0 : i32
    return %arg0, %c0_i32 : i32, i32
  }
  func.func @transform_1(%arg0: i32) -> (i32, i32) {
    %c0_i32 = arith.constant 0 : i32
    %c0_i32_0 = arith.constant 0 : i32
    return %arg0, %c0_i32 : i32, i32
  }
  func.func @transform_2(%arg0: i32) -> (i32, i32) {
    %c0_i32 = arith.constant 0 : i32
    %c0_i32_0 = arith.constant 0 : i32
    return %arg0, %c0_i32 : i32, i32
  }
  func.func @transform_3(%arg0: i32) -> (i32, i32) {
    %c0_i32 = arith.constant 0 : i32
    %c0_i32_0 = arith.constant 0 : i32
    %c0_i32_1 = arith.constant 0 : i32
    return %c0_i32, %c0_i32_0 : i32, i32
  }
  func.func @transform_4(%arg0: i32) -> (i32, i32) {
    %c0_i32 = arith.constant 0 : i32
    %c0_i32_0 = arith.constant 0 : i32
    %c0_i32_1 = arith.constant 0 : i32
    return %c0_i32, %c0_i32_0 : i32, i32
  }
  func.func @transform_5(%arg0: i32) -> (i32, i32) {
    %c0_i32 = arith.constant 0 : i32
    %c0_i32_0 = arith.constant 0 : i32
    %c0_i32_1 = arith.constant 0 : i32
    return %c0_i32, %c0_i32_0 : i32, i32
  }
  func.func @transform_6(%arg0: i32) -> (i32, i32) {
    %c0_i32 = arith.constant 0 : i32
    %c0_i32_0 = arith.constant 0 : i32
    %c0_i32_1 = arith.constant 0 : i32
    return %c0_i32, %c0_i32_0 : i32, i32
  }
  func.func @transform_7(%arg0: i32) -> (i32, i32) {
    %c0_i32 = arith.constant 0 : i32
    %c0_i32_0 = arith.constant 0 : i32
    return %arg0, %c0_i32 : i32, i32
  }
}

</mosaic_0001>

<llo_original>
// kernel: tpu_custom_call.1
$region0: #{tpu_custom_call.1}
  #allocation0 [shape = 'u32[]', space=smem, size = 0x4, offset = 0x4, fixed_abs, tag = 'smem constant byte address 0x4 - core index']
  #allocation1 [shape = 'u32[144,128]{1,0:T(1,128)}', space=vmem, size = 0x12000, scoped, tag = 'internal scratch']
  %s0 = inlined_call_operand.vmem [shape: f32[16,16], index: 0, kind: input, shape index: {}]
  %s1 = inlined_call_operand.vmem [shape: f32[16,8], index: 1, kind: input, shape index: {}]
  %s2 = inlined_call_operand.vmem [shape: f32[16,4], index: 2, kind: input, shape index: {}]
  %s3 = inlined_call_operand.hbm [shape: bf16[153,640], index: 3, kind: input, shape index: {}]
  %s4 = inlined_call_operand.vmem [shape: f32[1,128], index: 4, kind: input, shape index: {}]
  %s5 = inlined_call_operand.hbm [shape: bf16[128,128], index: 5, kind: input, shape index: {}]
  %s6 = inlined_call_operand.vmem [shape: f32[1,128], index: 6, kind: input, shape index: {}]
  %s7 = inlined_call_operand.hbm [shape: bf16[16,128], index: 7, kind: output, shape index: {}]
  %s8 = sld [smem:[#allocation0]]
  $region69: #{tpu_custom_call.1} parent=0
    _
  %s10 = ssub.s32 1, %s8
  %s11 = scalar_select 0, %s10, %s8
  $region1: #{tpu_custom_call.1} parent=0
    #allocation2 [shape = 'u8[204800]{0}', space=vmem, size = 0x32000, scoped, tag = 'input window, operand 3, single buffered']
    #allocation3 [shape = 's32[2]{0}', space=sflag, size = 0x8, scoped, tag = 'scoped memory for tpu_custom_call.1']
    #allocation4 [shape = 's32[2]{0}', space=sflag, size = 0x8, scoped, tag = 'scoped memory for tpu_custom_call.1']
    #allocation5 [shape = 'u8[32768]{0}', space=vmem, size = 0x8000, scoped, tag = 'input window, operand 5, single buffered']
    #allocation6 [shape = 's32[1]{0}', space=sflag, size = 0x4, scoped, tag = 'scoped memory for tpu_custom_call.1']
    #allocation7 [shape = 'u8[4096]{0}', space=vmem, size = 0x1000, scoped, tag = 'output window, operand 0']
    %12 = vsyncpa [#allocation3], 0
    %13 = vsyncpa [#allocation6], 0
    %14 = vsyncpa [#allocation4], 0
    %s15 = scalar_lea.sflag [#allocation4], 1
    %16 = vsyncpa %s15, 0
    loop: start=0, step=1, limit=4
    $region2: #{tpu_custom_call.1} parent=1 // loop_pre_header
      _
    $region3: #{tpu_custom_call.1} parent=1 // loop_header
      %s18 = sphi 0, %s22
      %p19 = scmp.ge.s32.totalorder %s18, 4
      %s28 = sphi 0, %s30
      %s31 = sphi 0, %s28
      %s32 = sphi 0, %s31
      %s48 = sphi 0, %s32
      %s54 = sphi 0, %s56
      %s57 = sphi 0, %s54
      %s58 = sphi 0, %s57
      %s74 = sphi 0, %s58
      %s80 = sphi 0, %s82
      %s83 = sphi 0, %s80
      %s84 = sphi 0, %s83
      %s100 = sphi 0, %s84
      %s104 = sphi 0, %s104
      %s106 = sphi 0, %s104
      %s107 = sphi 0, %s106
      %s121 = sphi 0, %s107
      %s125 = sphi 0, %s125
      %s127 = sphi 0, %s125
      %s128 = sphi 0, %s127
      %s142 = sphi 0, %s128
      %s146 = sphi 0, %s146
      %s148 = sphi 0, %s146
      %s149 = sphi 0, %s148
      %s163 = sphi 0, %s149
      %s167 = sphi 0, %s167
      %s169 = sphi 0, %s167
      %s170 = sphi 0, %s169
      %s184 = sphi 0, %s170
      %s190 = sphi 0, %s192
      %s193 = sphi 0, %s190
      %s194 = sphi 0, %s193
      %s210 = sphi 0, %s194
    $region4: #{tpu_custom_call.1} parent=1 // loop_header_branch
      %21 = sbr.rel (%p19) target = $region8
    $region5: #{tpu_custom_call.1} parent=1 // loop_body
      %s23 = ssub.s32 %s18, 1
      %s24 = ssub.s32 %s18, 2
      %s25 = sadd.s32 %s18, 1
      %s26 = ssub.s32 %s18, %s25
      %p27 = scmp.eq.s32.totalorder %s26, 0
      %s29 = sadd.s32 %s28, 1
      %s30 = scalar_select %p27, %s28, %s29
      %p33 = pneg %p27
      %p34 = scmp.eq.s32.totalorder %s18, 1
      %p35 = por %p33, %p34
      %p36 = scmp.ne.s32.totalorder %s28, %s31
      %p37 = scmp.eq.s32.totalorder %s18, 0
      %p38 = por %p36, %p37
      %p39 = scmp.ne.s32.totalorder %s28, %s31
      %p40 = scmp.eq.s32.totalorder %s23, 1
      %p41 = por %p39, %p40
      %p42 = scmp.ne.s32.totalorder %s31, %s32
      %p43 = scmp.eq.s32.totalorder %s23, 0
      %p44 = por %p42, %p43
      %p45 = scmp.ne.s32.totalorder %s31, %s32
      %p46 = scmp.eq.s32.totalorder %s24, 1
      %p47 = por %p45, %p46
      %p49 = scmp.ne.s32.totalorder %s32, %s48
      %p50 = scmp.eq.s32.totalorder %s24, 0
      %p51 = por %p49, %p50
      %s52 = ssub.s32 %s18, %s25
      %p53 = scmp.eq.s32.totalorder %s52, 0
      %s55 = sadd.s32 %s54, 1
      %s56 = scalar_select %p53, %s54, %s55
      %p59 = pneg %p53
      %p60 = scmp.eq.s32.totalorder %s18, 1
      %p61 = por %p59, %p60
      %p62 = scmp.ne.s32.totalorder %s54, %s57
      %p63 = scmp.eq.s32.totalorder %s18, 0
      %p64 = por %p62, %p63
      %p65 = scmp.ne.s32.totalorder %s54, %s57
      %p66 = scmp.eq.s32.totalorder %s23, 1
      %p67 = por %p65, %p66
      %p68 = scmp.ne.s32.totalorder %s57, %s58
      %p69 = scmp.eq.s32.totalorder %s23, 0
      %p70 = por %p68, %p69
      %p71 = scmp.ne.s32.totalorder %s57, %s58
      %p72 = scmp.eq.s32.totalorder %s24, 1
      %p73 = por %p71, %p72
      %p75 = scmp.ne.s32.totalorder %s58, %s74
      %p76 = scmp.eq.s32.totalorder %s24, 0
      %p77 = por %p75, %p76
      %s78 = ssub.s32 %s18, %s25
      %p79 = scmp.eq.s32.totalorder %s78, 0
      %s81 = sadd.s32 %s80, 1
      %s82 = scalar_select %p79, %s80, %s81
      %p85 = pneg %p79
      %p86 = scmp.eq.s32.totalorder %s18, 1
      %p87 = por %p85, %p86
      %p88 = scmp.ne.s32.totalorder %s80, %s83
      %p89 = scmp.eq.s32.totalorder %s18, 0
      %p90 = por %p88, %p89
      %p91 = scmp.ne.s32.totalorder %s80, %s83
      %p92 = scmp.eq.s32.totalorder %s23, 1
      %p93 = por %p91, %p92
      %p94 = scmp.ne.s32.totalorder %s83, %s84
      %p95 = scmp.eq.s32.totalorder %s23, 0
      %p96 = por %p94, %p95
      %p97 = scmp.ne.s32.totalorder %s83, %s84
      %p98 = scmp.eq.s32.totalorder %s24, 1
      %p99 = por %p97, %p98
      %p101 = scmp.ne.s32.totalorder %s84, %s100
      %p102 = scmp.eq.s32.totalorder %s24, 0
      %p103 = por %p101, %p102
      %s105 = sadd.s32 %s104, 1
      %p108 = scmp.eq.s32.totalorder %s18, 1
      %p109 = scmp.ne.s32.totalorder %s104, %s106
      %p110 = scmp.eq.s32.totalorder %s18, 0
      %p111 = por %p109, %p110
      %p112 = scmp.ne.s32.totalorder %s104, %s106
      %p113 = scmp.eq.s32.totalorder %s23, 1
      %p114 = por %p112, %p113
      %p115 = scmp.ne.s32.totalorder %s106, %s107
      %p116 = scmp.eq.s32.totalorder %s23, 0
      %p117 = por %p115, %p116
      %p118 = scmp.ne.s32.totalorder %s106, %s107
      %p119 = scmp.eq.s32.totalorder %s24, 1
      %p120 = por %p118, %p119
      %p122 = scmp.ne.s32.totalorder %s107, %s121
      %p123 = scmp.eq.s32.totalorder %s24, 0
      %p124 = por %p122, %p123
      %s126 = sadd.s32 %s125, 1
      %p129 = scmp.eq.s32.totalorder %s18, 1
      %p130 = scmp.ne.s32.totalorder %s125, %s127
      %p131 = scmp.eq.s32.totalorder %s18, 0
      %p132 = por %p130, %p131
      %p133 = scmp.ne.s32.totalorder %s125, %s127
      %p134 = scmp.eq.s32.totalorder %s23, 1
      %p135 = por %p133, %p134
      %p136 = scmp.ne.s32.totalorder %s127, %s128
      %p137 = scmp.eq.s32.totalorder %s23, 0
      %p138 = por %p136, %p137
      %p139 = scmp.ne.s32.totalorder %s127, %s128
      %p140 = scmp.eq.s32.totalorder %s24, 1
      %p141 = por %p139, %p140
      %p143 = scmp.ne.s32.totalorder %s128, %s142
      %p144 = scmp.eq.s32.totalorder %s24, 0
      %p145 = por %p143, %p144
      %s147 = sadd.s32 %s146, 1
      %p150 = scmp.eq.s32.totalorder %s18, 1
      %p151 = scmp.ne.s32.totalorder %s146, %s148
      %p152 = scmp.eq.s32.totalorder %s18, 0
      %p153 = por %p151, %p152
      %p154 = scmp.ne.s32.totalorder %s146, %s148
      %p155 = scmp.eq.s32.totalorder %s23, 1
      %p156 = por %p154, %p155
      %p157 = scmp.ne.s32.totalorder %s148, %s149
      %p158 = scmp.eq.s32.totalorder %s23, 0
      %p159 = por %p157, %p158
      %p160 = scmp.ne.s32.totalorder %s148, %s149
      %p161 = scmp.eq.s32.totalorder %s24, 1
      %p162 = por %p160, %p161
      %p164 = scmp.ne.s32.totalorder %s149, %s163
      %p165 = scmp.eq.s32.totalorder %s24, 0
      %p166 = por %p164, %p165
      %s168 = sadd.s32 %s167, 1
      %p171 = scmp.eq.s32.totalorder %s18, 1
      %p172 = scmp.ne.s32.totalorder %s167, %s169
      %p173 = scmp.eq.s32.totalorder %s18, 0
      %p174 = por %p172, %p173
      %p175 = scmp.ne.s32.totalorder %s167, %s169
      %p176 = scmp.eq.s32.totalorder %s23, 1
      %p177 = por %p175, %p176
      %p178 = scmp.ne.s32.totalorder %s169, %s170
      %p179 = scmp.eq.s32.totalorder %s23, 0
      %p180 = por %p178, %p179
      %p181 = scmp.ne.s32.totalorder %s169, %s170
      %p182 = scmp.eq.s32.totalorder %s24, 1
      %p183 = por %p181, %p182
      %p185 = scmp.ne.s32.totalorder %s170, %s184
      %p186 = scmp.eq.s32.totalorder %s24, 0
      %p187 = por %p185, %p186
      %s188 = ssub.s32 %s18, %s25
      %p189 = scmp.eq.s32.totalorder %s188, 0
      %s191 = sadd.s32 %s190, 1
      %s192 = scalar_select %p189, %s190, %s191
      %p195 = pneg %p189
      %p196 = scmp.eq.s32.totalorder %s18, 1
      %p197 = por %p195, %p196
      %p198 = scmp.ne.s32.totalorder %s190, %s193
      %p199 = scmp.eq.s32.totalorder %s18, 0
      %p200 = por %p198, %p199
      %p201 = scmp.ne.s32.totalorder %s190, %s193
      %p202 = scmp.eq.s32.totalorder %s23, 1
      %p203 = por %p201, %p202
      %p204 = scmp.ne.s32.totalorder %s193, %s194
      %p205 = scmp.eq.s32.totalorder %s23, 0
      %p206 = por %p204, %p205
      %p207 = scmp.ne.s32.totalorder %s193, %s194
      %p208 = scmp.eq.s32.totalorder %s24, 1
      %p209 = por %p207, %p208
      %p211 = scmp.ne.s32.totalorder %s194, %s210
      %p212 = scmp.eq.s32.totalorder %s24, 0
      %p213 = por %p211, %p212
      %p214 = scmp.le.s32.totalorder 1, %s18
      %p215 = scmp.lt.s32.totalorder %s18, 3
      %p216 = pnand %p214, %p215
      %p217 = pneg %p216
      // Predicated region
      $region9: #{tpu_custom_call.1} parent=5 // pred_check
        _
      $region10: #{tpu_custom_call.1} parent=5 // pred_check_branch
        %219 = sbr.rel (%p216) target = $region12
      $region11: #{tpu_custom_call.1} parent=5 // pred_region
        %s220 = ssub.s32 %s18, 1
        // Predicated region
        $region13: #{tpu_custom_call.1} parent=11 // pred_check
          %p221 = pneg %p117
        $region14: #{tpu_custom_call.1} parent=11 // pred_check_branch
          %223 = sbr.rel (%p221) target = $region16
        $region15: #{tpu_custom_call.1} parent=11 // pred_region
          %s225 = ssub.s32 6400, 6400
          %226 = vsyncadd [#allocation3], %s225
          %s227 = sshll.u32 [#allocation2], 4
          %s228 = int_to_ptr.vmem [resolvable:$true] %s227
          %233 = dma.hbm_to_vmem [thread:$0]  %s3, 6400, %s228, [#allocation3], 320, 320, 20
        $region16: #{tpu_custom_call.1} parent=11 // pred_fallthru
          _
        // Predicated region
        $region17: #{tpu_custom_call.1} parent=11 // pred_check
          %p234 = pneg %p138
        $region18: #{tpu_custom_call.1} parent=11 // pred_check_branch
          %236 = sbr.rel (%p234) target = $region20
        $region19: #{tpu_custom_call.1} parent=11 // pred_region
          _
        $region20: #{tpu_custom_call.1} parent=11 // pred_fallthru
          _
        // Predicated region
        $region21: #{tpu_custom_call.1} parent=11 // pred_check
          %p237 = pneg %p159
        $region22: #{tpu_custom_call.1} parent=11 // pred_check_branch
          %239 = sbr.rel (%p237) target = $region24
        $region23: #{tpu_custom_call.1} parent=11 // pred_region
          %s241 = ssub.s32 1024, 1024
          %242 = vsyncadd [#allocation6], %s241
          %s243 = sshll.u32 [#allocation5], 4
          %s244 = int_to_ptr.vmem [resolvable:$true] %s243
          %249 = dma.hbm_to_vmem [thread:$0]  %s5, 1024, %s244, [#allocation6], 64, 64, 4
        $region24: #{tpu_custom_call.1} parent=11 // pred_fallthru
          _
        // Predicated region
        $region25: #{tpu_custom_call.1} parent=11 // pred_check
          %p250 = pneg %p180
        $region26: #{tpu_custom_call.1} parent=11 // pred_check_branch
          %252 = sbr.rel (%p250) target = $region28
        $region27: #{tpu_custom_call.1} parent=11 // pred_region
          _
        $region28: #{tpu_custom_call.1} parent=11 // pred_fallthru
          _
      $region12: #{tpu_custom_call.1} parent=5 // pred_fallthru
        _
      %p253 = scmp.lt.s32.totalorder %s18, 2
      // Predicated region
      $region29: #{tpu_custom_call.1} parent=5 // pred_check
        %p254 = pneg %p253
      $region30: #{tpu_custom_call.1} parent=5 // pred_check_branch
        %256 = sbr.rel (%p254) target = $region32
      $region31: #{tpu_custom_call.1} parent=5 // pred_region
        // Predicated region
        $region33: #{tpu_custom_call.1} parent=31 // pred_check
          %p257 = pneg %p38
        $region34: #{tpu_custom_call.1} parent=31 // pred_check_branch
          %259 = sbr.rel (%p257) target = $region36
        $region35: #{tpu_custom_call.1} parent=31 // pred_region
          %p260 = scmp.lt.s32.totalorder %s18, 1
          %s261 = scalar_select %p260, %s18, 1
          %s262 = smul.addr %s261, 8
          %s263 = scalar_lea.vmem %s0, %s262
        $region36: #{tpu_custom_call.1} parent=31 // pred_fallthru
          _
        // Predicated region
        $region37: #{tpu_custom_call.1} parent=31 // pred_check
          %p264 = pneg %p64
        $region38: #{tpu_custom_call.1} parent=31 // pred_check_branch
          %266 = sbr.rel (%p264) target = $region40
        $region39: #{tpu_custom_call.1} parent=31 // pred_region
          %p267 = scmp.lt.s32.totalorder %s18, 1
          %s268 = scalar_select %p267, %s18, 1
          %s269 = smul.addr %s268, 8
          %s270 = scalar_lea.vmem %s1, %s269
        $region40: #{tpu_custom_call.1} parent=31 // pred_fallthru
          _
        // Predicated region
        $region41: #{tpu_custom_call.1} parent=31 // pred_check
          %p271 = pneg %p90
        $region42: #{tpu_custom_call.1} parent=31 // pred_check_branch
          %273 = sbr.rel (%p271) target = $region44
        $region43: #{tpu_custom_call.1} parent=31 // pred_region
          %p274 = scmp.lt.s32.totalorder %s18, 1
          %s275 = scalar_select %p274, %s18, 1
          %s276 = smul.addr %s275, 8
          %s277 = scalar_lea.vmem %s2, %s276
        $region44: #{tpu_custom_call.1} parent=31 // pred_fallthru
          _
      $region32: #{tpu_custom_call.1} parent=5 // pred_fallthru
        _
      %p278 = scmp.le.s32.totalorder 1, %s18
      %p279 = scmp.lt.s32.totalorder %s18, 3
      %p280 = pnand %p278, %p279
      %p281 = pneg %p280
      // Predicated region
      $region45: #{tpu_custom_call.1} parent=5 // pred_check
        _
      $region46: #{tpu_custom_call.1} parent=5 // pred_check_branch
        %283 = sbr.rel (%p280) target = $region48
      $region47: #{tpu_custom_call.1} parent=5 // pred_region
        %s284 = ssub.s32 %s18, 1
        // Predicated region
        $region49: #{tpu_custom_call.1} parent=47 // pred_check
          %p285 = pneg %p117
        $region50: #{tpu_custom_call.1} parent=47 // pred_check_branch
          %287 = sbr.rel (%p285) target = $region52
        $region51: #{tpu_custom_call.1} parent=47 // pred_region
          %288 = dma.done [#allocation3], 6400
        $region52: #{tpu_custom_call.1} parent=47 // pred_fallthru
          _
        // Predicated region
        $region53: #{tpu_custom_call.1} parent=47 // pred_check
          %p289 = pneg %p159
        $region54: #{tpu_custom_call.1} parent=47 // pred_check_branch
          %291 = sbr.rel (%p289) target = $region56
        $region55: #{tpu_custom_call.1} parent=47 // pred_region
          %292 = dma.done [#allocation6], 1024
        $region56: #{tpu_custom_call.1} parent=47 // pred_fallthru
          _
        %p293 = scmp.lt.s32.totalorder %s23, 1
        %s294 = scalar_select %p293, %s23, 1
        %s295 = smul.addr %s294, 8
        %s296 = scalar_lea.vmem %s0, %s295
        %p297 = pneg %p44
        %p298 = pneg %p41
        %p299 = scmp.lt.s32.totalorder %s23, 1
        %s300 = scalar_select %p299, %s23, 1
        %s301 = smul.addr %s300, 8
        %s302 = scalar_lea.vmem %s1, %s301
        %p303 = pneg %p70
        %p304 = pneg %p67
        %p305 = scmp.lt.s32.totalorder %s23, 1
        %s306 = scalar_select %p305, %s23, 1
        %s307 = smul.addr %s306, 8
        %s308 = scalar_lea.vmem %s2, %s307
        %p309 = pneg %p96
        %p310 = pneg %p93
        %p311 = pneg %p117
        %p312 = pneg %p114
        %p313 = pneg %p138
        %p314 = pneg %p135
        %p315 = pneg %p159
        %p316 = pneg %p156
        %p317 = pneg %p180
        %p318 = pneg %p177
        %p319 = pneg %p206
        %p320 = pneg %p203
        %s321 = sand.u32 %s193, 1
        %s322 = scalar_lea.sflag [#allocation4], %s321
        %s323 = sand.u32 %s193, 1
        %s324 = smul.addr %s323, 4
        %s325 = scalar_lea.vmem [#allocation7], %s324
        %p326 = scmp.lt.s32.totalorder %s23, 1
        %s327 = scalar_select %p326, %s23, 1
        %s328 = smul.addr %s327, 8
        %s329 = scalar_lea.vmem %s0, %s328
        %p330 = scmp.lt.s32.totalorder %s23, 1
        %s331 = scalar_select %p330, %s23, 1
        %s332 = smul.addr %s331, 8
        %s333 = scalar_lea.vmem %s1, %s332
        %p334 = scmp.lt.s32.totalorder %s23, 1
        %s335 = scalar_select %p334, %s23, 1
        %s336 = smul.addr %s335, 8
        %s337 = scalar_lea.vmem %s2, %s336
        %v339 = vld [vmem:[%s329] sm:$0xff]
        %v340 = vld [vmem:[%s333] sm:$0xff]
        %v341 = vld [vmem:[%s337] sm:$0xff]
        %343 = vrot.lane.b32.xlu0 %v339, 1
        %v344 = vpop.permute.xlu0 %343
        %vm346 = vcmask 7168
        %v347 = vsel %vm346, 1.0, %v344
        %349 = vset.pattern.permute.xlu0 0
        %350 = vperm.xlu0 %349, %v340
        %v351 = vpop.permute.xlu0 %350
        %v353 = vmul.f32 %v351, %v347
        %354 = vset.pattern.permute.xlu0 1
        %355 = vperm.xlu0 %354, %v340
        %v356 = vpop.permute.xlu0 %355
        %v358 = vmul.f32 %v356, %v347
        %359 = vset.pattern.permute.xlu0 2
        %360 = vperm.xlu0 %359, %v340
        %v361 = vpop.permute.xlu0 %360
        %v363 = vmul.f32 %v361, %v347
        %364 = vset.pattern.permute.xlu0 3
        %365 = vperm.xlu0 %364, %v340
        %v366 = vpop.permute.xlu0 %365
        %v368 = vmul.f32 %v366, %v347
        %369 = vset.pattern.permute.xlu0 4
        %370 = vperm.xlu0 %369, %v340
        %v371 = vpop.permute.xlu0 %370
        %v373 = vmul.f32 %v371, %v347
        %374 = vset.pattern.permute.xlu0 5
        %375 = vperm.xlu0 %374, %v340
        %v376 = vpop.permute.xlu0 %375
        %v378 = vmul.f32 %v376, %v347
        %379 = vset.pattern.permute.xlu0 6
        %380 = vperm.xlu0 %379, %v340
        %v381 = vpop.permute.xlu0 %380
        %v383 = vmul.f32 %v381, %v347
        %384 = vset.pattern.permute.xlu0 7
        %385 = vperm.xlu0 %384, %v340
        %v386 = vpop.permute.xlu0 %385
        %v388 = vmul.f32 %v386, %v347
        %390 = vrot.lane.b32.xlu0 %v353, 17
        %v391 = vpop.permute.xlu0 %390
        %394 = vrot.lane.b32.xlu0 %v358, 34
        %v395 = vpop.permute.xlu0 %394
        %398 = vrot.lane.b32.xlu0 %v363, 51
        %v399 = vpop.permute.xlu0 %398
        %402 = vrot.lane.b32.xlu0 %v368, 68
        %v403 = vpop.permute.xlu0 %402
        %406 = vrot.lane.b32.xlu0 %v373, 85
        %v407 = vpop.permute.xlu0 %406
        %410 = vrot.lane.b32.xlu0 %v378, 102
        %v411 = vpop.permute.xlu0 %410
        %414 = vrot.lane.b32.xlu0 %v383, 119
        %v415 = vpop.permute.xlu0 %414
        %418 = vrot.lane.b32.xlu0 %v388, 8
        %v419 = vpop.permute.xlu0 %418
        %vm421 = vcmask 138240
        %v422 = vsel %vm421, %v347, %v391
        %vm423 = vcmask 277504
        %v424 = vsel %vm423, %v422, %v395
        %vm425 = vcmask 416768
        %v426 = vsel %vm425, %v424, %v399
        %vm427 = vcmask 556032
        %v428 = vsel %vm427, %v426, %v403
        %vm429 = vcmask 695296
        %v430 = vsel %vm429, %v428, %v407
        %vm431 = vcmask 834560
        %v432 = vsel %vm431, %v430, %v411
        %vm433 = vcmask 973824
        %v434 = vsel %vm433, %v432, %v415
        %vm435 = vcmask 64512
        %v436 = vsel %vm435, %v415, %v419
        %v437 = vpack.c.bf16 %v434, %v434
        %v438 = vpack.c.bf16 %v436, %v436
        %v439 = vld [vmem:[#allocation2] sm:$0xff]
        %v440 = vld [vmem:[#allocation2 + $0x8] sm:$0xff]
        %v441 = vld [vmem:[#allocation2 + $0x10] sm:$0xf]
        %v442 = vld [vmem:[#allocation2 + $0x14] sm:$0xff]
        %v443 = vld [vmem:[#allocation2 + $0x1c] sm:$0xff]
        %v444 = vld [vmem:[#allocation2 + $0x24] sm:$0xf]
        %v445 = vld [vmem:[#allocation2 + $0x28] sm:$0xff]
        %v446 = vld [vmem:[#allocation2 + $0x30] sm:$0xff]
        %v447 = vld [vmem:[#allocation2 + $0x38] sm:$0xf]
        %v448 = vld [vmem:[#allocation2 + $0x3c] sm:$0xff]
        %v449 = vld [vmem:[#allocation2 + $0x44] sm:$0xff]
        %v450 = vld [vmem:[#allocation2 + $0x4c] sm:$0xf]
        %v451 = vld [vmem:[#allocation2 + $0x50] sm:$0xff]
        %v452 = vld [vmem:[#allocation2 + $0x58] sm:$0xff]
        %v453 = vld [vmem:[#allocation2 + $0x60] sm:$0xf]
        %v454 = vld [vmem:[#allocation2 + $0x64] sm:$0xff]
        %v455 = vld [vmem:[#allocation2 + $0x6c] sm:$0xff]
        %v456 = vld [vmem:[#allocation2 + $0x74] sm:$0xf]
        %v457 = vld [vmem:[#allocation2 + $0x78] sm:$0xff]
        %v458 = vld [vmem:[#allocation2 + $0x80] sm:$0xff]
        %v459 = vld [vmem:[#allocation2 + $0x88] sm:$0xf]
        %v460 = vld [vmem:[#allocation2 + $0x8c] sm:$0xff]
        %v461 = vld [vmem:[#allocation2 + $0x94] sm:$0xff]
        %v462 = vld [vmem:[#allocation2 + $0x9c] sm:$0xf]
        %v463 = vld [vmem:[#allocation2 + $0xa0] sm:$0xff]
        %v464 = vld [vmem:[#allocation2 + $0xa8] sm:$0xff]
        %v465 = vld [vmem:[#allocation2 + $0xb0] sm:$0xf]
        %v466 = vld [vmem:[#allocation2 + $0xb4] sm:$0xff]
        %v467 = vld [vmem:[#allocation2 + $0xbc] sm:$0xff]
        %v468 = vld [vmem:[#allocation2 + $0xc4] sm:$0xf]
        %v469 = vld [vmem:[#allocation2 + $0xc8] sm:$0xff]
        %v470 = vld [vmem:[#allocation2 + $0xd0] sm:$0xff]
        %v471 = vld [vmem:[#allocation2 + $0xd8] sm:$0xf]
        %v472 = vld [vmem:[#allocation2 + $0xdc] sm:$0xff]
        %v473 = vld [vmem:[#allocation2 + $0xe4] sm:$0xff]
        %v474 = vld [vmem:[#allocation2 + $0xec] sm:$0xf]
        %v475 = vld [vmem:[#allocation2 + $0xf0] sm:$0xff]
        %v476 = vld [vmem:[#allocation2 + $0xf8] sm:$0xff]
        %v477 = vld [vmem:[#allocation2 + $0x100] sm:$0xf]
        %v478 = vld [vmem:[#allocation2 + $0x104] sm:$0xff]
        %v479 = vld [vmem:[#allocation2 + $0x10c] sm:$0xff]
        %v480 = vld [vmem:[#allocation2 + $0x114] sm:$0xf]
        %v481 = vld [vmem:[#allocation2 + $0x118] sm:$0xff]
        %v482 = vld [vmem:[#allocation2 + $0x120] sm:$0xff]
        %v483 = vld [vmem:[#allocation2 + $0x128] sm:$0xf]
        %v484 = vld [vmem:[#allocation2 + $0x12c] sm:$0xff]
        %v485 = vld [vmem:[#allocation2 + $0x134] sm:$0xff]
        %v486 = vld [vmem:[#allocation2 + $0x13c] sm:$0xf]
        %v487 = vld [vmem:[#allocation2 + $0x140] sm:$0xff]
        %v488 = vld [vmem:[#allocation2 + $0x148] sm:$0xff]
        %v489 = vld [vmem:[#allocation2 + $0x150] sm:$0xf]
        %v490 = vld [vmem:[#allocation2 + $0x154] sm:$0xff]
        %v491 = vld [vmem:[#allocation2 + $0x15c] sm:$0xff]
        %v492 = vld [vmem:[#allocation2 + $0x164] sm:$0xf]
        %v493 = vld [vmem:[#allocation2 + $0x168] sm:$0xff]
        %v494 = vld [vmem:[#allocation2 + $0x170] sm:$0xff]
        %v495 = vld [vmem:[#allocation2 + $0x178] sm:$0xf]
        %v496 = vld [vmem:[#allocation2 + $0x17c] sm:$0x11]
        %v497 = vld [vmem:[#allocation2 + $0x184] sm:$0x11]
        %v498 = vld [vmem:[#allocation2 + $0x18c] sm:$0x1]
        %v559 = vunpack.c.l.b16 %v439
        %v560 = vunpack.c.h.b16 %v439
        %v561 = vunpack.c.l.b16 %v440
        %v562 = vunpack.c.h.b16 %v440
        %v563 = vunpack.c.l.b16 %v441
        %v564 = vunpack.c.l.b16 %v442
        %v565 = vunpack.c.h.b16 %v442
        %v566 = vunpack.c.l.b16 %v443
        %v567 = vunpack.c.h.b16 %v443
        %v568 = vunpack.c.l.b16 %v444
        %v569 = vunpack.c.l.b16 %v445
        %v570 = vunpack.c.h.b16 %v445
        %v571 = vunpack.c.l.b16 %v446
        %v572 = vunpack.c.h.b16 %v446
        %v573 = vunpack.c.l.b16 %v447
        %v574 = vunpack.c.l.b16 %v448
        %v575 = vunpack.c.h.b16 %v448
        %v576 = vunpack.c.l.b16 %v449
        %v577 = vunpack.c.h.b16 %v449
        %v578 = vunpack.c.l.b16 %v450
        %v579 = vunpack.c.l.b16 %v451
        %v580 = vunpack.c.h.b16 %v451
        %v581 = vunpack.c.l.b16 %v452
        %v582 = vunpack.c.h.b16 %v452
        %v583 = vunpack.c.l.b16 %v453
        %v584 = vunpack.c.l.b16 %v454
        %v585 = vunpack.c.h.b16 %v454
        %v586 = vunpack.c.l.b16 %v455
        %v587 = vunpack.c.h.b16 %v455
        %v588 = vunpack.c.l.b16 %v456
        %v589 = vunpack.c.l.b16 %v457
        %v590 = vunpack.c.h.b16 %v457
        %v591 = vunpack.c.l.b16 %v458
        %v592 = vunpack.c.h.b16 %v458
        %v593 = vunpack.c.l.b16 %v459
        %v594 = vunpack.c.l.b16 %v460
        %v595 = vunpack.c.h.b16 %v460
        %v596 = vunpack.c.l.b16 %v461
        %v597 = vunpack.c.h.b16 %v461
        %v598 = vunpack.c.l.b16 %v462
        %v599 = vunpack.c.l.b16 %v463
        %v600 = vunpack.c.h.b16 %v463
        %v601 = vunpack.c.l.b16 %v464
        %v602 = vunpack.c.h.b16 %v464
        %v603 = vunpack.c.l.b16 %v465
        %v604 = vunpack.c.l.b16 %v466
        %v605 = vunpack.c.h.b16 %v466
        %v606 = vunpack.c.l.b16 %v467
        %v607 = vunpack.c.h.b16 %v467
        %v608 = vunpack.c.l.b16 %v468
        %v609 = vunpack.c.l.b16 %v469
        %v610 = vunpack.c.h.b16 %v469
        %v611 = vunpack.c.l.b16 %v470
        %v612 = vunpack.c.h.b16 %v470
        %v613 = vunpack.c.l.b16 %v471
        %v614 = vunpack.c.l.b16 %v472
        %v615 = vunpack.c.h.b16 %v472
        %v616 = vunpack.c.l.b16 %v473
        %v617 = vunpack.c.h.b16 %v473
        %v618 = vunpack.c.l.b16 %v474
        %v619 = vunpack.c.l.b16 %v475
        %v620 = vunpack.c.h.b16 %v475
        %v621 = vunpack.c.l.b16 %v476
        %v622 = vunpack.c.h.b16 %v476
        %v623 = vunpack.c.l.b16 %v477
        %v624 = vunpack.c.l.b16 %v478
        %v625 = vunpack.c.h.b16 %v478
        %v626 = vunpack.c.l.b16 %v479
        %v627 = vunpack.c.h.b16 %v479
        %v628 = vunpack.c.l.b16 %v480
        %v629 = vunpack.c.l.b16 %v481
        %v630 = vunpack.c.h.b16 %v481
        %v631 = vunpack.c.l.b16 %v482
        %v632 = vunpack.c.h.b16 %v482
        %v633 = vunpack.c.l.b16 %v483
        %v634 = vunpack.c.l.b16 %v484
        %v635 = vunpack.c.h.b16 %v484
        %v636 = vunpack.c.l.b16 %v485
        %v637 = vunpack.c.h.b16 %v485
        %v638 = vunpack.c.l.b16 %v486
        %v639 = vunpack.c.l.b16 %v487
        %v640 = vunpack.c.h.b16 %v487
        %v641 = vunpack.c.l.b16 %v488
        %v642 = vunpack.c.h.b16 %v488
        %v643 = vunpack.c.l.b16 %v489
        %v644 = vunpack.c.l.b16 %v490
        %v645 = vunpack.c.h.b16 %v490
        %v646 = vunpack.c.l.b16 %v491
        %v647 = vunpack.c.h.b16 %v491
        %v648 = vunpack.c.l.b16 %v492
        %v649 = vunpack.c.l.b16 %v493
        %v650 = vunpack.c.h.b16 %v493
        %v651 = vunpack.c.l.b16 %v494
        %v652 = vunpack.c.h.b16 %v494
        %v653 = vunpack.c.l.b16 %v495
        %v654 = vunpack.c.l.b16 %v496
        %v655 = vunpack.c.h.b16 %v496
        %v656 = vunpack.c.l.b16 %v497
        %v657 = vunpack.c.h.b16 %v497
        %v658 = vunpack.c.l.b16 %v498
        %v659 = vpack.c.b16 %v564, %v559
        %v660 = vpack.c.b16 %v565, %v560
        %v661 = vpack.c.b16 %v566, %v561
        %v662 = vpack.c.b16 %v567, %v562
        %v663 = vpack.c.b16 %v568, %v563
        %v664 = vpack.c.b16 %v574, %v569
        %v665 = vpack.c.b16 %v575, %v570
        %v666 = vpack.c.b16 %v576, %v571
        %v667 = vpack.c.b16 %v577, %v572
        %v668 = vpack.c.b16 %v578, %v573
        %v669 = vpack.c.b16 %v584, %v579
        %v670 = vpack.c.b16 %v585, %v580
        %v671 = vpack.c.b16 %v586, %v581
        %v672 = vpack.c.b16 %v587, %v582
        %v673 = vpack.c.b16 %v588, %v583
        %v674 = vpack.c.b16 %v594, %v589
        %v675 = vpack.c.b16 %v595, %v590
        %v676 = vpack.c.b16 %v596, %v591
        %v677 = vpack.c.b16 %v597, %v592
        %v678 = vpack.c.b16 %v598, %v593
        %v679 = vpack.c.b16 %v604, %v599
        %v680 = vpack.c.b16 %v605, %v600
        %v681 = vpack.c.b16 %v606, %v601
        %v682 = vpack.c.b16 %v607, %v602
        %v683 = vpack.c.b16 %v608, %v603
        %v684 = vpack.c.b16 %v614, %v609
        %v685 = vpack.c.b16 %v615, %v610
        %v686 = vpack.c.b16 %v616, %v611
        %v687 = vpack.c.b16 %v617, %v612
        %v688 = vpack.c.b16 %v618, %v613
        %v689 = vpack.c.b16 %v624, %v619
        %v690 = vpack.c.b16 %v625, %v620
        %v691 = vpack.c.b16 %v626, %v621
        %v692 = vpack.c.b16 %v627, %v622
        %v693 = vpack.c.b16 %v628, %v623
        %v694 = vpack.c.b16 %v634, %v629
        %v695 = vpack.c.b16 %v635, %v630
        %v696 = vpack.c.b16 %v636, %v631
        %v697 = vpack.c.b16 %v637, %v632
        %v698 = vpack.c.b16 %v638, %v633
        %v699 = vpack.c.b16 %v644, %v639
        %v700 = vpack.c.b16 %v645, %v640
        %v701 = vpack.c.b16 %v646, %v641
        %v702 = vpack.c.b16 %v647, %v642
        %v703 = vpack.c.b16 %v648, %v643
        %v704 = vpack.c.b16 %v654, %v649
        %v705 = vpack.c.b16 %v655, %v650
        %v706 = vpack.c.b16 %v656, %v651
        %v707 = vpack.c.b16 %v657, %v652
        %v708 = vpack.c.b16 %v658, %v653
        %vm754 = vcmask 203776
        %v756 = vsel %vm754, %v438, 0
        %vm758 = vcmask 1043456
        %vm759 = vcmask 1044480
        %v760 = vsel %vm758, 4294967295, 65535
        %v761 = vsel %vm759, %v760, 0
        %v763 = vand.u32 %v704, %v761
        %v766 = vand.u32 %v705, %v761
        %v769 = vand.u32 %v706, %v761
        %v772 = vand.u32 %v707, %v761
        %v775 = vand.u32 %v708, %v761
        %777 = vmatprep.subr.bf16.mxu0 %v660
        %778 = vmatpush1.bf16.msra.mxu0 %v659
        %779 = vmatprep.subr.bf16.mxu0 %v665
        %780 = vmatpush1.bf16.msra.mxu0 %v664
        %781 = vmatprep.subr.bf16.mxu0 %v670
        %782 = vmatpush1.bf16.msra.mxu0 %v669
        %783 = vmatprep.subr.bf16.mxu0 %v675
        %784 = vmatpush1.bf16.msra.mxu0 %v674
        %785 = vmatprep.subr.bf16.mxu0 %v680
        %786 = vmatpush1.bf16.msra.mxu0 %v679
        %787 = vmatprep.subr.bf16.mxu0 %v685
        %788 = vmatpush1.bf16.msra.mxu0 %v684
        %789 = vmatprep.subr.bf16.mxu0 %v690
        %790 = vmatpush1.bf16.msra.mxu0 %v689
        %791 = vmatprep.subr.bf16.mxu0 %v695
        %792 = vmatpush1.bf16.msra.mxu0 %v694
        %793 = vmatprep.subr.bf16.mxu0 %v700
        %794 = vmatpush1.bf16.msra.mxu0 %v699
        %795 = vmatprep.subr.bf16.mxu0 %v766
        %796 = vmatpush1.bf16.msra.mxu0 %v763
        %797 = vmatprep.subr.bf16.mxu0 0
        %798 = vmatpush1.bf16.msra.mxu0 0
        %799 = vmatprep.subr.bf16.mxu0 0
        %800 = vmatpush1.bf16.msra.mxu0 0
        %801 = vmatprep.subr.bf16.mxu0 0
        %802 = vmatpush1.bf16.msra.mxu0 0
        %803 = vmatprep.subr.bf16.mxu0 0
        %804 = vmatpush1.bf16.msra.mxu0 0
        %805 = vmatprep.subr.bf16.mxu0 0
        %806 = vmatpush1.bf16.msra.mxu0 0
        %807 = vmatprep.subr.bf16.mxu0 0
        %808 = vmatpush1.bf16.msra.mxu0 0
        %809 = vmatprep.mubr.bf16.mxu0 %v756
        %810 = vmatmul.mubr.bf16.gmra.mrb[0].mxu0 %v437
        %v811 = vpop.f32.mrb[0].mxu0
        %v812 = vadd.f32 0.0, %v811
        %v813 = vpop.f32.mrb[0].mxu0
        %v814 = vadd.f32 0.0, %v813
        %v815 = vpop.f32.mrb[0].mxu0
        %v816 = vpop.f32.mrb[0].mxu0
        %817 = vdwg.mxu0
        %818 = vmatprep.subr.bf16.mxu0 %v662
        %819 = vmatpush1.bf16.msra.mxu0 %v661
        %820 = vmatprep.subr.bf16.mxu0 %v667
        %821 = vmatpush1.bf16.msra.mxu0 %v666
        %822 = vmatprep.subr.bf16.mxu0 %v672
        %823 = vmatpush1.bf16.msra.mxu0 %v671
        %824 = vmatprep.subr.bf16.mxu0 %v677
        %825 = vmatpush1.bf16.msra.mxu0 %v676
        %826 = vmatprep.subr.bf16.mxu0 %v682
        %827 = vmatpush1.bf16.msra.mxu0 %v681
        %828 = vmatprep.subr.bf16.mxu0 %v687
        %829 = vmatpush1.bf16.msra.mxu0 %v686
        %830 = vmatprep.subr.bf16.mxu0 %v692
        %831 = vmatpush1.bf16.msra.mxu0 %v691
        %832 = vmatprep.subr.bf16.mxu0 %v697
        %833 = vmatpush1.bf16.msra.mxu0 %v696
        %834 = vmatprep.subr.bf16.mxu0 %v702
        %835 = vmatpush1.bf16.msra.mxu0 %v701
        %836 = vmatprep.subr.bf16.mxu0 %v772
        %837 = vmatpush1.bf16.msra.mxu0 %v769
        %838 = vmatprep.subr.bf16.mxu0 0
        %839 = vmatpush1.bf16.msra.mxu0 0
        %840 = vmatprep.subr.bf16.mxu0 0
        %841 = vmatpush1.bf16.msra.mxu0 0
        %842 = vmatprep.subr.bf16.mxu0 0
        %843 = vmatpush1.bf16.msra.mxu0 0
        %844 = vmatprep.subr.bf16.mxu0 0
        %845 = vmatpush1.bf16.msra.mxu0 0
        %846 = vmatprep.subr.bf16.mxu0 0
        %847 = vmatpush1.bf16.msra.mxu0 0
        %848 = vmatprep.subr.bf16.mxu0 0
        %849 = vmatpush1.bf16.msra.mxu0 0
        %850 = vmatprep.mubr.bf16.mxu0 %v756
        %851 = vmatmul.mubr.bf16.gmra.mrb[0].mxu0 %v437
        %v852 = vpop.f32.mrb[0].mxu0
        %v853 = vadd.f32 0.0, %v852
        %v854 = vpop.f32.mrb[0].mxu0
        %v855 = vadd.f32 0.0, %v854
        %v856 = vpop.f32.mrb[0].mxu0
        %v857 = vpop.f32.mrb[0].mxu0
        %858 = vdwg.mxu0
        %859 = vmatprep.subr.bf16.mxu0 0
        %860 = vmatpush1.bf16.msra.mxu0 %v663
        %861 = vmatprep.subr.bf16.mxu0 0
        %862 = vmatpush1.bf16.msra.mxu0 %v668
        %863 = vmatprep.subr.bf16.mxu0 0
        %864 = vmatpush1.bf16.msra.mxu0 %v673
        %865 = vmatprep.subr.bf16.mxu0 0
        %866 = vmatpush1.bf16.msra.mxu0 %v678
        %867 = vmatprep.subr.bf16.mxu0 0
        %868 = vmatpush1.bf16.msra.mxu0 %v683
        %869 = vmatprep.subr.bf16.mxu0 0
        %870 = vmatpush1.bf16.msra.mxu0 %v688
        %871 = vmatprep.subr.bf16.mxu0 0
        %872 = vmatpush1.bf16.msra.mxu0 %v693
        %873 = vmatprep.subr.bf16.mxu0 0
        %874 = vmatpush1.bf16.msra.mxu0 %v698
        %875 = vmatprep.subr.bf16.mxu0 0
        %876 = vmatpush1.bf16.msra.mxu0 %v703
        %877 = vmatprep.subr.bf16.mxu0 0
        %878 = vmatpush1.bf16.msra.mxu0 %v775
        %879 = vmatprep.subr.bf16.mxu0 0
        %880 = vmatpush1.bf16.msra.mxu0 0
        %881 = vmatprep.subr.bf16.mxu0 0
        %882 = vmatpush1.bf16.msra.mxu0 0
        %883 = vmatprep.subr.bf16.mxu0 0
        %884 = vmatpush1.bf16.msra.mxu0 0
        %885 = vmatprep.subr.bf16.mxu0 0
        %886 = vmatpush1.bf16.msra.mxu0 0
        %887 = vmatprep.subr.bf16.mxu0 0
        %888 = vmatpush1.bf16.msra.mxu0 0
        %889 = vmatprep.subr.bf16.mxu0 0
        %890 = vmatpush1.bf16.msra.mxu0 0
        %891 = vmatprep.mubr.bf16.mxu0 %v756
        %892 = vmatmul.mubr.bf16.gmra.mrb[0].mxu0 %v437
        %v893 = vpop.f32.mrb[0].mxu0
        %v894 = vadd.f32 0.0, %v893
        %v895 = vpop.f32.mrb[0].mxu0
        %v896 = vpop.f32.mrb[0].mxu0
        %v897 = vpop.f32.mrb[0].mxu0
        %898 = vdwg.mxu0
        %900 = vset.pattern.permute.xlu0 0
        %901 = vperm.xlu0 %900, %v341
        %v902 = vpop.permute.xlu0 %901
        %v904 = vmul.f32 %v902, %v814
        %905 = vset.pattern.permute.xlu0 1
        %906 = vperm.xlu0 %905, %v341
        %v907 = vpop.permute.xlu0 %906
        %v909 = vmul.f32 %v907, %v853
        %910 = vset.pattern.permute.xlu0 2
        %911 = vperm.xlu0 %910, %v341
        %v912 = vpop.permute.xlu0 %911
        %v914 = vmul.f32 %v912, %v855
        %915 = vset.pattern.permute.xlu0 3
        %916 = vperm.xlu0 %915, %v341
        %v917 = vpop.permute.xlu0 %916
        %v919 = vmul.f32 %v917, %v894
        %v920 = vadd.f32 %v812, %v904
        %v921 = vadd.f32 %v909, %v914
        %v922 = vadd.f32 %v920, %v921
        %v923 = vadd.f32 %v922, %v919
        %v924 = vld [vmem:[%s4] sm:$0x1]
        %v926 = vlaneseq
        %v927 = vshrl.u32 %v926, 7
        %v928 = vsub.s32 0, %v927
        %v929 = vrot.slane %v924, %v928
        %v931 = vadd.f32 %v923, %v929
        %v932 = vmax.f32 %v931, 0.0
        %v933 = vpack.c.bf16 %v932, %v932
        %v934 = vld [vmem:[#allocation5] sm:$0xf]
        %v935 = vld [vmem:[#allocation5 + $0x4] sm:$0xf]
        %v936 = vld [vmem:[#allocation5 + $0x8] sm:$0xf]
        %v937 = vld [vmem:[#allocation5 + $0xc] sm:$0xf]
        %v938 = vld [vmem:[#allocation5 + $0x10] sm:$0xf]
        %v939 = vld [vmem:[#allocation5 + $0x14] sm:$0xf]
        %v940 = vld [vmem:[#allocation5 + $0x18] sm:$0xf]
        %v941 = vld [vmem:[#allocation5 + $0x1c] sm:$0xf]
        %v942 = vld [vmem:[#allocation5 + $0x20] sm:$0xf]
        %v943 = vld [vmem:[#allocation5 + $0x24] sm:$0xf]
        %v944 = vld [vmem:[#allocation5 + $0x28] sm:$0xf]
        %v945 = vld [vmem:[#allocation5 + $0x2c] sm:$0xf]
        %v946 = vld [vmem:[#allocation5 + $0x30] sm:$0xf]
        %v947 = vld [vmem:[#allocation5 + $0x34] sm:$0xf]
        %v948 = vld [vmem:[#allocation5 + $0x38] sm:$0xf]
        %v949 = vld [vmem:[#allocation5 + $0x3c] sm:$0xf]
        %v950 = vld [vmem:[%s6] sm:$0x1]
        %v952 = vlaneseq
        %v953 = vshrl.u32 %v952, 7
        %v954 = vsub.s32 0, %v953
        %v955 = vrot.slane %v950, %v954
        %v973 = vunpack.c.l.b16 %v934
        %v974 = vunpack.c.l.b16 %v935
        %v975 = vunpack.c.l.b16 %v936
        %v976 = vunpack.c.l.b16 %v937
        %v977 = vunpack.c.l.b16 %v938
        %v978 = vunpack.c.l.b16 %v939
        %v979 = vunpack.c.l.b16 %v940
        %v980 = vunpack.c.l.b16 %v941
        %v981 = vunpack.c.l.b16 %v942
        %v982 = vunpack.c.l.b16 %v943
        %v983 = vunpack.c.l.b16 %v944
        %v984 = vunpack.c.l.b16 %v945
        %v985 = vunpack.c.l.b16 %v946
        %v986 = vunpack.c.l.b16 %v947
        %v987 = vunpack.c.l.b16 %v948
        %v988 = vunpack.c.l.b16 %v949
        %v989 = vpack.c.b16 %v974, %v973
        %v990 = vpack.c.b16 %v976, %v975
        %v991 = vpack.c.b16 %v978, %v977
        %v992 = vpack.c.b16 %v980, %v979
        %v993 = vpack.c.b16 %v982, %v981
        %v994 = vpack.c.b16 %v984, %v983
        %v995 = vpack.c.b16 %v986, %v985
        %v996 = vpack.c.b16 %v988, %v987
        %1005 = vmatprep.subr.bf16.mxu0 0
        %1006 = vmatpush1.bf16.msra.mxu0 %v989
        %1007 = vmatprep.subr.bf16.mxu0 0
        %1008 = vmatpush1.bf16.msra.mxu0 %v990
        %1009 = vmatprep.subr.bf16.mxu0 0
        %1010 = vmatpush1.bf16.msra.mxu0 %v991
        %1011 = vmatprep.subr.bf16.mxu0 0
        %1012 = vmatpush1.bf16.msra.mxu0 %v992
        %1013 = vmatprep.subr.bf16.mxu0 0
        %1014 = vmatpush1.bf16.msra.mxu0 %v993
        %1015 = vmatprep.subr.bf16.mxu0 0
        %1016 = vmatpush1.bf16.msra.mxu0 %v994
        %1017 = vmatprep.subr.bf16.mxu0 0
        %1018 = vmatpush1.bf16.msra.mxu0 %v995
        %1019 = vmatprep.subr.bf16.mxu0 0
        %1020 = vmatpush1.bf16.msra.mxu0 %v996
        %1021 = vmatprep.subr.bf16.mxu0 0
        %1022 = vmatpush1.bf16.msra.mxu0 0
        %1023 = vmatprep.subr.bf16.mxu0 0
        %1024 = vmatpush1.bf16.msra.mxu0 0
        %1025 = vmatprep.subr.bf16.mxu0 0
        %1026 = vmatpush1.bf16.msra.mxu0 0
        %1027 = vmatprep.subr.bf16.mxu0 0
        %1028 = vmatpush1.bf16.msra.mxu0 0
        %1029 = vmatprep.subr.bf16.mxu0 0
        %1030 = vmatpush1.bf16.msra.mxu0 0
        %1031 = vmatprep.subr.bf16.mxu0 0
        %1032 = vmatpush1.bf16.msra.mxu0 0
        %1033 = vmatprep.subr.bf16.mxu0 0
        %1034 = vmatpush1.bf16.msra.mxu0 0
        %1035 = vmatprep.subr.bf16.mxu0 0
        %1036 = vmatpush1.bf16.msra.mxu0 0
        %1037 = vmatprep.mubr.bf16.mxu0 0
        %1038 = vmatmul.mubr.bf16.gmra.mrb[0].mxu0 %v933
        %v1039 = vpop.f32.mrb[0].mxu0
        %v1040 = vadd.f32 %v955, %v1039
        %v1041 = vpop.f32.mrb[0].mxu0
        %v1042 = vpop.f32.mrb[0].mxu0
        %v1043 = vpop.f32.mrb[0].mxu0
        %1044 = vdwg.mxu0
        %v1045 = vmax.f32 %v1040, 0.0
        %v1046 = vpack.c.bf16 %v1045, %v1045
        %1047 = vst [vmem:[%s325] sm:$0xf] %v1046
        %s1048 = sand.u32 %s193, 1
        %s1049 = scalar_lea.sflag [#allocation4], %s1048
        %s1050 = sand.u32 %s193, 1
        %s1051 = smul.addr %s1050, 4
        %s1052 = scalar_lea.vmem [#allocation7], %s1051
        // Predicated region
        $region57: #{tpu_custom_call.1} parent=47 // pred_check
          %p1053 = pneg %p203
        $region58: #{tpu_custom_call.1} parent=47 // pred_check_branch
          %1055 = sbr.rel (%p1053) target = $region60
        $region59: #{tpu_custom_call.1} parent=47 // pred_region
          %s1057 = ssub.s32 64, 64
          %1058 = vsyncadd %s1049, %s1057
          %s1059 = smul.addr %s23, 64
          %s1060 = scalar_lea.hbm %s7, %s1059
          %s1062 = sshll.u32 %s1052, 4
          %s1063 = int_to_ptr.vmem [resolvable:$true] %s1062
          %1065 = dma.vmem_to_hbm [thread:$0]  %s1063, 64, %s1060, %s1049
        $region60: #{tpu_custom_call.1} parent=47 // pred_fallthru
          _
      $region48: #{tpu_custom_call.1} parent=5 // pred_fallthru
        _
      %p1066 = scmp.le.s32.totalorder 2, %s18
      // Predicated region
      $region61: #{tpu_custom_call.1} parent=5 // pred_check
        %p1067 = pneg %p1066
      $region62: #{tpu_custom_call.1} parent=5 // pred_check_branch
        %1069 = sbr.rel (%p1067) target = $region64
      $region63: #{tpu_custom_call.1} parent=5 // pred_region
        %s1070 = ssub.s32 %s18, 2
        // Predicated region
        $region65: #{tpu_custom_call.1} parent=63 // pred_check
          %p1071 = pneg %p209
        $region66: #{tpu_custom_call.1} parent=63 // pred_check_branch
          %1073 = sbr.rel (%p1071) target = $region68
        $region67: #{tpu_custom_call.1} parent=63 // pred_region
          %s1074 = sand.u32 %s194, 1
          %s1075 = scalar_lea.sflag [#allocation4], %s1074
          %s1076 = sand.u32 %s194, 1
          %s1077 = smul.addr %s1076, 4
          %s1078 = scalar_lea.vmem [#allocation7], %s1077
          %1079 = dma.done %s1075, 64
        $region68: #{tpu_custom_call.1} parent=63 // pred_fallthru
          _
      $region64: #{tpu_custom_call.1} parent=5 // pred_fallthru
        _
    $region6: #{tpu_custom_call.1} parent=1 // loop_footer
      %s22 = sadd.s32 1, %s18
    $region7: #{tpu_custom_call.1} parent=1 // loop_footer_branch
      %17 = sbr.rel target = $region3
    $region8: #{tpu_custom_call.1} parent=1 // loop_exit
      _
    %1080 = vsyncpa [#allocation3], 1
    %s1081 = scalar_lea.sflag [#allocation3], 1
    %1082 = vsyncpa %s1081, 1
    %1083 = vsyncpa [#allocation6], 1
    %1084 = vsyncpa [#allocation4], 1
    %s1085 = scalar_lea.sflag [#allocation4], 1
    %1086 = vsyncpa %s1085, 1

</llo_original>
